<compile_context>
chip_gen: v7x
topology: tpu7x:2x2x1
jax: 0.10.0
libtpu: 0.0.40
codegen_flags: <defaults>
</compile_context>

<pallas_src>
import jax
import jax.numpy as jnp
from jax.experimental import pallas as pl
from jax.experimental.pallas import tpu as pltpu


# ---------------------------------------------------------------------------
# SIPModel equivalent — forward is a no-op, so no kernel is launched for it.
# ---------------------------------------------------------------------------
class SIPModel:
    """JAX/Pallas counterpart of the (empty) PyTorch SIPModel."""

    def __init__(self):
        # The reference __init__ defines no parameters / buffers.
        pass

    def forward(self):
        # Reference forward() body is `pass` -> returns None; there is no
        # computation to lower into a Pallas kernel, so we launch nothing.
        return None

    __call__ = forward


# ---------------------------------------------------------------------------
# Minimal Pallas plumbing-demo kernel: direct HBM->HBM async-copy identity.
# ---------------------------------------------------------------------------
def _hbm_copy_kernel(x_hbm_ref, o_hbm_ref, copy_sem):
    # Single whole-array DMA, HBM -> HBM.  No VMEM staging, no vreg traffic,
    # zero VLIW vector-slot usage on every TPU generation.
    cp = pltpu.make_async_copy(x_hbm_ref, o_hbm_ref, copy_sem)
    cp.start()
    cp.wait()


def pallas_identity(x2d):
    """Identity copy of a 2-D array via one direct HBM->HBM DMA.

    Shape-agnostic: no tiling, no (8, 128) block constraints, no scoped-VMEM
    footprint.  Bytes accessed = read N + write N.
    """
    nbytes = x2d.size * jnp.dtype(x2d.dtype).itemsize
    return pl.pallas_call(
        _hbm_copy_kernel,
        out_shape=jax.ShapeDtypeStruct(x2d.shape, x2d.dtype),
        in_specs=[pl.BlockSpec(memory_space=pl.ANY)],
        out_specs=pl.BlockSpec(memory_space=pl.ANY),
        scratch_shapes=[pltpu.SemaphoreType.DMA(())],
        cost_estimate=pl.CostEstimate(
            flops=0, transcendentals=0, bytes_accessed=2 * nbytes
        ),
    )(x2d)


if __name__ == "__main__":
    key = jax.random.PRNGKey(0)

    # Small NCHW-style example tensor (NOT consumed by SIPModel.forward, which
    # takes no inputs — used only to drive the demo copy kernel).
    x = jax.random.normal(key, (2, 4, 16, 16), dtype=jnp.float32)

    # 1) Exact-semantics forward: no inputs, returns None, zero kernel launches.
    model = SIPModel()
    out = model()
    assert out is None, "SIPModel.forward must return None (reference is `pass`)"

    # 2) Run the Pallas plumbing demo once to validate the TPU lowering path.
    #    Lane-dense 2-D view (last dim = 128); copied in one HBM->HBM DMA.
    x2d = x.reshape(16, 128)
    y2d = pallas_identity(x2d)
    y2d = jax.block_until_ready(y2d)
    assert jnp.allclose(y2d, x2d), "identity kernel mismatch"

    print("KERNEL_OK")
</pallas_src>

<mosaic_0001>
module attributes {stable_mosaic.version = 11 : i64} {
  func.func @_hbm_copy_kernel(%arg0: memref<16x128xf32, #tpu.memory_space<any>>, %arg1: memref<16x128xf32, #tpu.memory_space<any>>, %arg2: memref<!tpu.dma_semaphore, #tpu.memory_space<semaphore_mem>>) attributes {dimension_semantics = [], scalar_prefetch = 0 : i64, scratch_operands = 1 : i64, tpu.core_type = #tpu.core_type<tc>} {
    tpu.enqueue_dma source(%arg0 : memref<16x128xf32, #tpu.memory_space<any>>) target(%arg1 : memref<16x128xf32, #tpu.memory_space<any>>) target_semaphore(%arg2 : memref<!tpu.dma_semaphore, #tpu.memory_space<semaphore_mem>>)
    tpu.wait_dma2 semaphore(%arg2 : memref<!tpu.dma_semaphore, #tpu.memory_space<semaphore_mem>>) src(%arg0 : memref<16x128xf32, #tpu.memory_space<any>>) dst(%arg1 : memref<16x128xf32, #tpu.memory_space<any>>)
    return
  }
}

</mosaic_0001>

<llo_original>
// kernel: tpu_custom_call.1
$region0: #{tpu_custom_call.1}
  #allocation0 [shape = 'u32[]', space=smem, size = 0x4, offset = 0x4, fixed_abs, tag = 'smem constant byte address 0x4 - core index']
  #allocation1 [shape = 'u32[144,128]{1,0:T(1,128)}', space=vmem, size = 0x12000, scoped, tag = 'internal scratch']
  #allocation2 [shape = 's32[1]{0}', space=sflag, size = 0x4, scoped, tag = 'scratch operand']
  #allocation3 [shape = 's32[]', space=sflag, size = 0x4, offset = 0, fixed_abs, tag = 'sflag constant byte address 0x0 - dummy sync flag']
  #allocation4 [shape = 'u32[0]{0}', space=smem, size = 0, offset = 0, fixed_abs, tag = 'smem constant byte address 0x0 - null']
  %s0 = inlined_call_operand.hbm [shape: f32[16,128], index: 0, kind: input, shape index: {}]
  %s1 = inlined_call_operand.hbm [shape: f32[16,128], index: 1, kind: output, shape index: {}]
  %s2 = sld [smem:[#allocation0]]
  $region2: #{tpu_custom_call.1} parent=0
    _
  %s4 = ssub.s32 1, %s2
  %s5 = scalar_select 0, %s4, %s2
  %s7 = sshll.u32 1, 14
  %s8 = sxor.u32 4294967295, %s7
  %s11 = sshll.u32 3, 24
  %s12 = sxor.u32 4294967295, %s11
  %s13 = sand.u32 0, %s12
  %s15 = sor.u32 %s13, 0
  %18 = dma.general %s0, 256, %s1, [#allocation2], [#allocation3], [#allocation4], %s15, 0
  %s19 = smul.u32 16, 1
  %s20 = sshll.u32 %s19, 4
  %21 = dma.done [#allocation2], %s20
  %22 = vsyncmov [#allocation2]
  %s23 = vpop.sfrf %22
  %p24 = scmp.eq.s32.totalorder %s23, 0
  %p25 = pneg %p24
  %27 = shalt.err (%p25)

</llo_original>
